<compile_context>
chip_gen: v7x
topology: tpu7x:2x2x1
jax: 0.10.0
libtpu: 0.0.40
codegen_flags: <defaults>
</compile_context>

<pallas_src>
import jax
import jax.numpy as jnp
from jax import lax
from jax.experimental import pallas as pl
from jax.experimental.pallas import tpu as pltpu


def _attn_kernel(x_ref, m1_ref, m2_ref, mask_ref, o_ref):
    # x_ref: (TB, S, D); m1_ref/m2_ref: (TB, S, S); mask_ref: (1, S, S);
    # o_ref: (TB, S, D)

    # Feed the MXU bf16 (native throughput on v5e/v6e/v7x); accumulate in f32.
    xb = x_ref[...].astype(jnp.bfloat16)

    # qk = x @ x^T expressed as a contraction over D with a batch dim:
    # no explicit transpose, so the MXU consumes the operand directly.
    qk = lax.dot_general(
        xb, xb,
        dimension_numbers=(((2,), (2,)), ((0,), (0,))),
        preferred_element_type=jnp.float32,
    )

    # Additive biases in f32. The (1, S, S) mask broadcasts over the batch tile.
    qk = qk + mask_ref[...] + m1_ref[...] + m2_ref[...]

    # Numerically stable softmax (f32). Normalization via approx reciprocal
    # (EUP slot, essentially free after the exp), applied to the f32 PV
    # accumulator instead of dividing the (TB, S, S) probabilities.
    qk = qk - jnp.max(qk, axis=-1, keepdims=True)
    p = jnp.exp(qk)
    inv_denom = pl.reciprocal(jnp.sum(p, axis=-1, keepdims=True), approx=True)

    # output = attn @ x  (bf16 operands, f32 accumulation).
    pv = lax.dot_general(
        p.astype(jnp.bfloat16), xb,
        dimension_numbers=(((2,), (1,)), ((0,), (0,))),
        preferred_element_type=jnp.float32,
    )
    # D=64 / S=56 means lanes are only partially filled; accepted at these
    # shapes (packing two heads along the last dim would be a layout change
    # in the surrounding model, not the kernel).
    o_ref[...] = (pv * inv_denom).astype(o_ref.dtype)


def _device_info():
    """(num_tensorcores_per_chip, physical VMEM bytes per TensorCore)."""
    kind = ""
    try:
        kind = jax.devices()[0].device_kind.lower()
    except Exception:
        pass
    if "v7" in kind:
        num_cores, vmem_cap = 2, 64 * 1024 * 1024
    elif ("v4" in kind) or ("v5p" in kind) or ("v5 p" in kind):
        num_cores, vmem_cap = 2, 128 * 1024 * 1024
    else:  # v5e / v6e / unknown -> conservative single-TC assumption
        num_cores, vmem_cap = 1, 128 * 1024 * 1024
    # Prefer the compiler's own view of VMEM capacity when available.
    try:
        info = pltpu.get_tpu_info()
        cap = getattr(info, "vmem_capacity_bytes", None)
        if cap:
            vmem_cap = int(cap)
    except Exception:
        pass
    return num_cores, vmem_cap


def _block_vmem_bytes(tb, S, D):
    """Rough VMEM footprint of one grid step for batch-tile tb (f32 inputs)."""
    f32 = 4
    x_blk = tb * S * D * f32
    bias_blk = tb * S * S * f32
    mask_blk = S * S * f32
    out_blk = tb * S * D * f32
    # Inputs/outputs are double-buffered by the pipeline; mask is resident but
    # budget two buffers to stay conservative.
    io = 2 * (x_blk + 2 * bias_blk + out_blk) + 2 * mask_blk
    # Live f32 intermediates: qk and p (tb,S,S), bf16 xb, f32 pv.
    live = 2 * tb * S * S * f32 + tb * S * D * (2 + f32)
    return io + live


def _pick_batch_tile(B, S, D, num_cores, vmem_budget):
    """VMEM-aware batch tile: largest divisor of B whose step fits the budget;
    on multi-TC chips prefer a grid step count that is a multiple of the core
    count, on single-TC chips prefer a single grid step."""
    divisors = [d for d in range(1, B + 1) if B % d == 0]
    fitting = [d for d in divisors if _block_vmem_bytes(d, S, D) <= vmem_budget]
    if not fitting:
        fitting = [1]  # smallest possible tile; let the compiler complain if even this is too big
    if num_cores >= 2:
        even = [d for d in fitting if (B // d) % num_cores == 0]
        if even:
            return max(even)
        multi = [d for d in fitting if (B // d) >= num_cores]
        if multi:
            return max(multi)
        return max(fitting)
    # Single TensorCore: fewest grid steps that fit (ideally exactly one).
    return max(fitting)


def attention_model(x, m1, m2, mask):
    """Pallas equivalent of the PyTorch Model.forward."""
    B, S, D = x.shape
    assert m1.shape == (B, S, S)
    assert m2.shape == (B, S, S)
    assert mask.shape == (1, S, S)

    num_cores, vmem_cap = _device_info()
    vmem_budget = int(0.55 * vmem_cap)            # tile-sizing budget
    vmem_limit = int(0.75 * vmem_cap)             # explicit scoped-VMEM limit (headroom kept)

    tb = _pick_batch_tile(B, S, D, num_cores, vmem_budget)
    grid = (B // tb,)

    itemsize = jnp.dtype(x.dtype).itemsize
    cost = pl.CostEstimate(
        flops=4 * B * S * S * D,                  # QK^T and PV matmuls
        transcendentals=B * S * S,                # exp in the softmax
        bytes_accessed=(2 * B * S * D             # x in, out
                        + 2 * B * S * S           # m1, m2
                        + S * S) * itemsize,      # mask
    )

    return pl.pallas_call(
        _attn_kernel,
        out_shape=jax.ShapeDtypeStruct((B, S, D), x.dtype),
        grid_spec=pltpu.PrefetchScalarGridSpec(
            num_scalar_prefetch=0,
            grid=grid,
            in_specs=[
                pl.BlockSpec((tb, S, D), lambda b: (b, 0, 0)),   # x
                pl.BlockSpec((tb, S, S), lambda b: (b, 0, 0)),   # m1
                pl.BlockSpec((tb, S, S), lambda b: (b, 0, 0)),   # m2
                pl.BlockSpec((1, S, S), lambda b: (0, 0, 0)),    # mask (resident)
            ],
            out_specs=pl.BlockSpec((tb, S, D), lambda b: (b, 0, 0)),
        ),
        compiler_params=pltpu.CompilerParams(
            dimension_semantics=("parallel",),
            vmem_limit_bytes=vmem_limit,
        ),
        cost_estimate=cost,
    )(x, m1, m2, mask)


def reference_model_f32(x, m1, m2, mask):
    """Pure f32 reference (exact semantics of the PyTorch module)."""
    qk = jnp.einsum("bsd,btd->bst", x, x) + mask + m1 + m2
    attn = jax.nn.softmax(qk, axis=-1)
    return jnp.einsum("bst,btd->bsd", attn, x)


def reference_model_bf16(x, m1, m2, mask):
    """Precision-matched reference: same bf16 MXU feed / f32 accumulation as
    the kernel, so the kernel logic can be checked at tight tolerance."""
    xb = x.astype(jnp.bfloat16)
    qk = jnp.einsum("bsd,btd->bst", xb, xb,
                    preferred_element_type=jnp.float32)
    qk = qk + mask + m1 + m2
    attn = jax.nn.softmax(qk, axis=-1)
    out = jnp.einsum("bst,btd->bsd", attn.astype(jnp.bfloat16), xb,
                     preferred_element_type=jnp.float32)
    return out.astype(x.dtype)


def _make_inputs(key, B, S, D):
    kx, k1, k2, km = jax.random.split(key, 4)
    x = jax.random.normal(kx, (B, S, D), dtype=jnp.float32)
    m1 = jax.random.normal(k1, (B, S, S), dtype=jnp.float32)
    m2 = jax.random.normal(k2, (B, S, S), dtype=jnp.float32)
    # Additive attention mask of shape (1, S, S), -1e9 where masked
    # (mirrors the PyTorch script's (1, 56, 56) mask broadcast over batch).
    mask = jnp.where(jax.random.uniform(km, (1, S, S)) > 0.7,
                     -1e9, 0.0).astype(jnp.float32)
    return x, m1, m2, mask


def _check_case(key, B, S, D):
    x, m1, m2, mask = _make_inputs(key, B, S, D)
    out = jax.block_until_ready(attention_model(x, m1, m2, mask))
    assert out.shape == (B, S, D)

    # Tight check against the precision-matched reference (verifies kernel
    # logic: biases, softmax, normalization, PV).
    ref_bf16 = reference_model_bf16(x, m1, m2, mask)
    assert jnp.allclose(out, ref_bf16, atol=2e-2, rtol=2e-2), \
        f"mismatch vs bf16-matched reference (B={B},S={S},D={D})"

    # Loose sanity check against the exact f32 semantics of the module
    # (difference comes only from feeding the MXU bf16 operands).
    ref_f32 = reference_model_f32(x, m1, m2, mask)
    assert jnp.allclose(out, ref_f32, atol=1.5e-1, rtol=1.5e-1), \
        f"mismatch vs f32 reference (B={B},S={S},D={D})"


if __name__ == "__main__":
    key = jax.random.PRNGKey(0)
    k_a, k_b = jax.random.split(key)

    # Shapes consistent with the module's (1, 56, 56) mask.
    _check_case(k_a, B=2, S=56, D=64)   # 1 step on 1-TC parts, 2 steps on 2-TC parts
    _check_case(k_b, B=8, S=56, D=64)   # exercises VMEM-aware batch tiling

    print("KERNEL_OK")
</pallas_src>

<mosaic_0001>
module attributes {stable_mosaic.version = 11 : i64} {
  func.func @_attn_kernel(%arg0: i32, %arg1: memref<2x56x64xf32, #tpu.memory_space<vmem>>, %arg2: memref<2x56x56xf32, #tpu.memory_space<vmem>>, %arg3: memref<2x56x56xf32, #tpu.memory_space<vmem>>, %arg4: memref<1x56x56xf32, #tpu.memory_space<vmem>>, %arg5: memref<2x56x64xf32, #tpu.memory_space<vmem>>) attributes {dimension_semantics = [#tpu.dimension_semantics<parallel>], iteration_bounds = array<i64: 1>, scalar_prefetch = 0 : i64, scratch_operands = 0 : i64, tpu.core_type = #tpu.core_type<tc>, window_params = [{transform_indices = @transform_0, window_bounds = array<i64: 2, 56, 64>}, {transform_indices = @transform_1, window_bounds = array<i64: 2, 56, 56>}, {transform_indices = @transform_2, window_bounds = array<i64: 2, 56, 56>}, {pipeline_mode = #tpu.pipeline_mode<synchronous>, transform_indices = @transform_3, window_bounds = array<i64: 1, 56, 56>}, {transform_indices = @transform_4, window_bounds = array<i64: 2, 56, 64>}]} {
    %c0 = arith.constant 0 : index
    %c0_0 = arith.constant 0 : index
    %c0_1 = arith.constant 0 : index
    %0 = vector.load %arg1[%c0, %c0_0, %c0_1] : memref<2x56x64xf32, #tpu.memory_space<vmem>>, vector<2x56x64xf32>
    %1 = arith.truncf %0 : vector<2x56x64xf32> to vector<2x56x64xbf16>
    %cst = arith.constant dense<0.000000e+00> : vector<2x56x56xf32>
    %2 = tpu.matmul %1, %1, %cst {dimension_numbers = #tpu.dot_dimension_numbers<[2], [2], [1], [1], [0, 0, 0, 1, 1, 1], [0], [0]>} : vector<2x56x64xbf16>, vector<2x56x64xbf16>, vector<2x56x56xf32> -> vector<2x56x56xf32>
    %c0_2 = arith.constant 0 : index
    %c0_3 = arith.constant 0 : index
    %c0_4 = arith.constant 0 : index
    %3 = vector.load %arg4[%c0_2, %c0_3, %c0_4] : memref<1x56x56xf32, #tpu.memory_space<vmem>>, vector<1x56x56xf32>
    %4 = vector.broadcast %3 : vector<1x56x56xf32> to vector<2x56x56xf32>
    %5 = arith.addf %2, %4 : vector<2x56x56xf32>
    %c0_5 = arith.constant 0 : index
    %c0_6 = arith.constant 0 : index
    %c0_7 = arith.constant 0 : index
    %6 = vector.load %arg2[%c0_5, %c0_6, %c0_7] : memref<2x56x56xf32, #tpu.memory_space<vmem>>, vector<2x56x56xf32>
    %7 = arith.addf %5, %6 : vector<2x56x56xf32>
    %c0_8 = arith.constant 0 : index
    %c0_9 = arith.constant 0 : index
    %c0_10 = arith.constant 0 : index
    %8 = vector.load %arg3[%c0_8, %c0_9, %c0_10] : memref<2x56x56xf32, #tpu.memory_space<vmem>>, vector<2x56x56xf32>
    %9 = arith.addf %7, %8 : vector<2x56x56xf32>
    %cst_11 = arith.constant dense<0xFF800000> : vector<2x56xf32>
    %10 = vector.multi_reduction <maximumf>, %9, %cst_11 [2] : vector<2x56x56xf32> to vector<2x56xf32>
    %11 = vector.shape_cast %10 : vector<2x56xf32> to vector<2x56x1xf32>
    %12 = vector.broadcast %11 : vector<2x56x1xf32> to vector<2x56x56xf32>
    %13 = arith.subf %9, %12 : vector<2x56x56xf32>
    %14 = math.exp %13 : vector<2x56x56xf32>
    %cst_12 = arith.constant dense<0.000000e+00> : vector<2x56xf32>
    %15 = vector.multi_reduction <add>, %14, %cst_12 [2] : vector<2x56x56xf32> to vector<2x56xf32>
    %16 = vector.shape_cast %15 : vector<2x56xf32> to vector<2x56x1xf32>
    %17 = tpu.reciprocal %16 {approx = true} : vector<2x56x1xf32> -> vector<2x56x1xf32>
    %18 = arith.truncf %14 : vector<2x56x56xf32> to vector<2x56x56xbf16>
    %cst_13 = arith.constant dense<0.000000e+00> : vector<2x56x64xf32>
    %19 = tpu.matmul %18, %1, %cst_13 {dimension_numbers = #tpu.dot_dimension_numbers<[2], [1], [1], [2], [0, 0, 0, 1, 1, 2], [0], [0]>} : vector<2x56x56xbf16>, vector<2x56x64xbf16>, vector<2x56x64xf32> -> vector<2x56x64xf32>
    %20 = vector.broadcast %17 : vector<2x56x1xf32> to vector<2x56x64xf32>
    %21 = arith.mulf %19, %20 : vector<2x56x64xf32>
    %c0_14 = arith.constant 0 : index
    %c0_15 = arith.constant 0 : index
    %c0_16 = arith.constant 0 : index
    %22 = vector.load %arg5[%c0_14, %c0_15, %c0_16] : memref<2x56x64xf32, #tpu.memory_space<vmem>>, vector<2x56x64xf32>
    tpu.vector_store %arg5[%c0_14, %c0_15, %c0_16], %21 {strides = array<i32>} : memref<2x56x64xf32, #tpu.memory_space<vmem>>, vector<2x56x64xf32>,
    return
  }
  func.func @transform_0(%arg0: i32) -> (i32, i32, i32) {
    %c0_i32 = arith.constant 0 : i32
    %c0_i32_0 = arith.constant 0 : i32
    %c0_i32_1 = arith.constant 0 : i32
    return %arg0, %c0_i32, %c0_i32_0 : i32, i32, i32
  }
  func.func @transform_1(%arg0: i32) -> (i32, i32, i32) {
    %c0_i32 = arith.constant 0 : i32
    %c0_i32_0 = arith.constant 0 : i32
    %c0_i32_1 = arith.constant 0 : i32
    return %arg0, %c0_i32, %c0_i32_0 : i32, i32, i32
  }
  func.func @transform_2(%arg0: i32) -> (i32, i32, i32) {
    %c0_i32 = arith.constant 0 : i32
    %c0_i32_0 = arith.constant 0 : i32
    %c0_i32_1 = arith.constant 0 : i32
    return %arg0, %c0_i32, %c0_i32_0 : i32, i32, i32
  }
  func.func @transform_3(%arg0: i32) -> (i32, i32, i32) {
    %c0_i32 = arith.constant 0 : i32
    %c0_i32_0 = arith.constant 0 : i32
    %c0_i32_1 = arith.constant 0 : i32
    %c0_i32_2 = arith.constant 0 : i32
    return %c0_i32, %c0_i32_0, %c0_i32_1 : i32, i32, i32
  }
  func.func @transform_4(%arg0: i32) -> (i32, i32, i32) {
    %c0_i32 = arith.constant 0 : i32
    %c0_i32_0 = arith.constant 0 : i32
    %c0_i32_1 = arith.constant 0 : i32
    return %arg0, %c0_i32, %c0_i32_0 : i32, i32, i32
  }
}

</mosaic_0001>

<llo_original>
// kernel: tpu_custom_call.1
$region0: #{tpu_custom_call.1}
  #allocation0 [shape = 'u32[]', space=smem, size = 0x4, offset = 0x4, fixed_abs, tag = 'smem constant byte address 0x4 - core index']
  #allocation1 [shape = 'u32[144,128]{1,0:T(1,128)}', space=vmem, size = 0x12000, scoped, tag = 'internal scratch']
  %s0 = inlined_call_operand.hbm [shape: f32[2,56,64], index: 0, kind: input, shape index: {}]
  %s1 = inlined_call_operand.hbm [shape: f32[2,56,56], index: 1, kind: input, shape index: {}]
  %s2 = inlined_call_operand.hbm [shape: f32[2,56,56], index: 2, kind: input, shape index: {}]
  %s3 = inlined_call_operand.hbm [shape: f32[1,56,56], index: 3, kind: input, shape index: {}]
  %s4 = inlined_call_operand.hbm [shape: f32[2,56,64], index: 4, kind: output, shape index: {}]
  %s5 = sld [smem:[#allocation0]]
  $region42: #{tpu_custom_call.1} parent=0
    _
  %s7 = ssub.s32 1, %s5
  %s8 = scalar_select 0, %s7, %s5
  $region1: #{tpu_custom_call.1} parent=0
    #allocation2 [shape = 'u8[57344]{0}', space=vmem, size = 0xe000, scoped, tag = 'input window, operand 0, single buffered']
    #allocation3 [shape = 's32[1]{0}', space=sflag, size = 0x4, scoped, tag = 'scoped memory for tpu_custom_call.1']
    #allocation4 [shape = 's32[1]{0}', space=sflag, size = 0x4, scoped, tag = 'scoped memory for tpu_custom_call.1']
    #allocation5 [shape = 'u8[57344]{0}', space=vmem, size = 0xe000, scoped, tag = 'input window, operand 1, single buffered']
    #allocation6 [shape = 's32[1]{0}', space=sflag, size = 0x4, scoped, tag = 'scoped memory for tpu_custom_call.1']
    #allocation7 [shape = 'u8[57344]{0}', space=vmem, size = 0xe000, scoped, tag = 'input window, operand 2, single buffered']
    #allocation8 [shape = 'u8[28672]{0}', space=vmem, size = 0x7000, scoped, tag = 'input window, operand 3, single buffered']
    #allocation9 [shape = 's32[1]{0}', space=sflag, size = 0x4, scoped, tag = 'scoped memory for tpu_custom_call.1']
    #allocation10 [shape = 'u8[57344]{0}', space=vmem, size = 0xe000, scoped, tag = 'output window, operand 0, single buffered']
    %9 = vsyncpa [#allocation3], 0
    %10 = vsyncpa [#allocation6], 0
    %11 = vsyncpa [#allocation9], 0
    %12 = vsyncpa [#allocation4], 0
    // Predicated region
    $region2: #{tpu_custom_call.1} parent=1 // pred_check
      _
    $region3: #{tpu_custom_call.1} parent=1 // pred_check_branch
      %14 = sbr.rel (0) target = $region5
    $region4: #{tpu_custom_call.1} parent=1 // pred_region
      %s16 = ssub.s32 1792, 1792
      %17 = vsyncadd [#allocation3], %s16
      %s18 = sshll.u32 [#allocation2], 4
      %s19 = int_to_ptr.vmem [resolvable:$true] %s18
      %24 = dma.hbm_to_vmem [thread:$0]  %s0, 1792, %s19, [#allocation3], 128, 128, 8
    $region5: #{tpu_custom_call.1} parent=1 // pred_fallthru
      _
    // Predicated region
    $region6: #{tpu_custom_call.1} parent=1 // pred_check
      _
    $region7: #{tpu_custom_call.1} parent=1 // pred_check_branch
      %26 = sbr.rel (0) target = $region9
    $region8: #{tpu_custom_call.1} parent=1 // pred_region
      %s28 = ssub.s32 1792, 1792
      %29 = vsyncadd [#allocation6], %s28
      %s30 = sshll.u32 [#allocation5], 4
      %s31 = int_to_ptr.vmem [resolvable:$true] %s30
      %36 = dma.hbm_to_vmem [thread:$0]  %s1, 1792, %s31, [#allocation6], 128, 128, 8
    $region9: #{tpu_custom_call.1} parent=1 // pred_fallthru
      _
    // Predicated region
    $region10: #{tpu_custom_call.1} parent=1 // pred_check
      _
    $region11: #{tpu_custom_call.1} parent=1 // pred_check_branch
      %38 = sbr.rel (0) target = $region13
    $region12: #{tpu_custom_call.1} parent=1 // pred_region
      %s40 = ssub.s32 1792, 1792
      %41 = vsyncadd [#allocation6], %s40
      %s42 = sshll.u32 [#allocation7], 4
      %s43 = int_to_ptr.vmem [resolvable:$true] %s42
      %48 = dma.hbm_to_vmem [thread:$0]  %s2, 1792, %s43, [#allocation6], 128, 128, 8
    $region13: #{tpu_custom_call.1} parent=1 // pred_fallthru
      _
    // Predicated region
    $region14: #{tpu_custom_call.1} parent=1 // pred_check
      _
    $region15: #{tpu_custom_call.1} parent=1 // pred_check_branch
      %50 = sbr.rel (0) target = $region17
    $region16: #{tpu_custom_call.1} parent=1 // pred_region
      %s52 = ssub.s32 896, 896
      %53 = vsyncadd [#allocation9], %s52
      %s54 = sshll.u32 [#allocation8], 4
      %s55 = int_to_ptr.vmem [resolvable:$true] %s54
      %60 = dma.hbm_to_vmem [thread:$0]  %s3, 896, %s55, [#allocation9], 128, 128, 8
    $region17: #{tpu_custom_call.1} parent=1 // pred_fallthru
      _
    // Predicated region
    $region18: #{tpu_custom_call.1} parent=1 // pred_check
      _
    $region19: #{tpu_custom_call.1} parent=1 // pred_check_branch
      %62 = sbr.rel (0) target = $region21
    $region20: #{tpu_custom_call.1} parent=1 // pred_region
      %63 = dma.done [#allocation3], 1792
    $region21: #{tpu_custom_call.1} parent=1 // pred_fallthru
      _
    // Predicated region
    $region22: #{tpu_custom_call.1} parent=1 // pred_check
      _
    $region23: #{tpu_custom_call.1} parent=1 // pred_check_branch
      %65 = sbr.rel (0) target = $region25
    $region24: #{tpu_custom_call.1} parent=1 // pred_region
      %66 = dma.done [#allocation6], 1792
    $region25: #{tpu_custom_call.1} parent=1 // pred_fallthru
      _
    // Predicated region
    $region26: #{tpu_custom_call.1} parent=1 // pred_check
      _
    $region27: #{tpu_custom_call.1} parent=1 // pred_check_branch
      %68 = sbr.rel (0) target = $region29
    $region28: #{tpu_custom_call.1} parent=1 // pred_region
      %69 = dma.done [#allocation6], 1792
    $region29: #{tpu_custom_call.1} parent=1 // pred_fallthru
      _
    // Predicated region
    $region30: #{tpu_custom_call.1} parent=1 // pred_check
      _
    $region31: #{tpu_custom_call.1} parent=1 // pred_check_branch
      %71 = sbr.rel (0) target = $region33
    $region32: #{tpu_custom_call.1} parent=1 // pred_region
      %72 = dma.done [#allocation9], 896
    $region33: #{tpu_custom_call.1} parent=1 // pred_fallthru
      _
    %v74 = vld [vmem:[#allocation2] sm:$0xff]
    %v75 = vld [vmem:[#allocation2 + $0x8] sm:$0xff]
    %v76 = vld [vmem:[#allocation2 + $0x10] sm:$0xff]
    %v77 = vld [vmem:[#allocation2 + $0x18] sm:$0xff]
    %v78 = vld [vmem:[#allocation2 + $0x20] sm:$0xff]
    %v79 = vld [vmem:[#allocation2 + $0x28] sm:$0xff]
    %v80 = vld [vmem:[#allocation2 + $0x30] sm:$0xff]
    %v81 = vld [vmem:[#allocation2 + $0x38] sm:$0xff]
    %v82 = vld [vmem:[#allocation2 + $0x40] sm:$0xff]
    %v83 = vld [vmem:[#allocation2 + $0x48] sm:$0xff]
    %v84 = vld [vmem:[#allocation2 + $0x50] sm:$0xff]
    %v85 = vld [vmem:[#allocation2 + $0x58] sm:$0xff]
    %v86 = vld [vmem:[#allocation2 + $0x60] sm:$0xff]
    %v87 = vld [vmem:[#allocation2 + $0x68] sm:$0xff]
    %v88 = vpack.c.bf16 %v75, %v74
    %v89 = vpack.c.bf16 %v77, %v76
    %v90 = vpack.c.bf16 %v79, %v78
    %v91 = vpack.c.bf16 %v80, %v80
    %v92 = vpack.c.bf16 %v82, %v81
    %v93 = vpack.c.bf16 %v84, %v83
    %v94 = vpack.c.bf16 %v86, %v85
    %v95 = vpack.c.bf16 %v87, %v87
    %v96 = vld [vmem:[#allocation8] sm:$0xff]
    %v97 = vld [vmem:[#allocation8 + $0x8] sm:$0xff]
    %v98 = vld [vmem:[#allocation8 + $0x10] sm:$0xff]
    %v99 = vld [vmem:[#allocation8 + $0x18] sm:$0xff]
    %v100 = vld [vmem:[#allocation8 + $0x20] sm:$0xff]
    %v101 = vld [vmem:[#allocation8 + $0x28] sm:$0xff]
    %v102 = vld [vmem:[#allocation8 + $0x30] sm:$0xff]
    %vm103 = vcmask 523264
    %v105 = vsel %vm103, %v88, 0
    %v108 = vsel %vm103, %v89, 0
    %v111 = vsel %vm103, %v90, 0
    %v114 = vsel %vm103, %v91, 0
    %116 = vmatprep.subr.bf16.mxu0 0
    %117 = vmatpush1.bf16.xpose.msra.mxu0 %v105
    %118 = vmatprep.subr.bf16.mxu0 0
    %119 = vmatpush1.bf16.xpose.msra.mxu0 %v108
    %120 = vmatprep.subr.bf16.mxu0 0
    %121 = vmatpush1.bf16.xpose.msra.mxu0 %v111
    %122 = vmatprep.subr.bf16.mxu0 0
    %123 = vmatpush1.bf16.xpose.msra.mxu0 %v114
    %124 = vmatprep.subr.bf16.mxu0 0
    %125 = vmatpush1.bf16.xpose.msra.mxu0 0
    %126 = vmatprep.subr.bf16.mxu0 0
    %127 = vmatpush1.bf16.xpose.msra.mxu0 0
    %128 = vmatprep.subr.bf16.mxu0 0
    %129 = vmatpush1.bf16.xpose.msra.mxu0 0
    %130 = vmatprep.subr.bf16.mxu0 0
    %131 = vmatpush1.bf16.xpose.msra.mxu0 0
    %132 = vmatprep.subr.bf16.mxu0 0
    %133 = vmatpush1.bf16.xpose.msra.mxu0 0
    %134 = vmatprep.subr.bf16.mxu0 0
    %135 = vmatpush1.bf16.xpose.msra.mxu0 0
    %136 = vmatprep.subr.bf16.mxu0 0
    %137 = vmatpush1.bf16.xpose.msra.mxu0 0
    %138 = vmatprep.subr.bf16.mxu0 0
    %139 = vmatpush1.bf16.xpose.msra.mxu0 0
    %140 = vmatprep.subr.bf16.mxu0 0
    %141 = vmatpush1.bf16.xpose.msra.mxu0 0
    %142 = vmatprep.subr.bf16.mxu0 0
    %143 = vmatpush1.bf16.xpose.msra.mxu0 0
    %144 = vmatprep.subr.bf16.mxu0 0
    %145 = vmatpush1.bf16.xpose.msra.mxu0 0
    %146 = vmatprep.subr.bf16.mxu0 0
    %147 = vmatpush1.bf16.xpose.msra.mxu0 0
    %148 = vmatprep.mubr.bf16.mxu0 0
    %149 = vmatmul.mubr.bf16.gmra.mrb[0].mxu0 %v105
    %v150 = vpop.f32.mrb[0].mxu0
    %v151 = vadd.f32 %v96, %v150
    %v152 = vpop.f32.mrb[0].mxu0
    %v153 = vpop.f32.mrb[0].mxu0
    %v154 = vadd.f32 %v97, %v153
    %v155 = vpop.f32.mrb[0].mxu0
    %156 = vmatprep.mubr.bf16.mxu0 0
    %157 = vmatmul.mubr.bf16.gmra.mrb[0].mxu0 %v108
    %v158 = vpop.f32.mrb[0].mxu0
    %v159 = vadd.f32 %v98, %v158
    %v160 = vpop.f32.mrb[0].mxu0
    %v161 = vpop.f32.mrb[0].mxu0
    %v162 = vadd.f32 %v99, %v161
    %v163 = vpop.f32.mrb[0].mxu0
    %164 = vmatprep.mubr.bf16.mxu0 0
    %165 = vmatmul.mubr.bf16.gmra.mrb[0].mxu0 %v111
    %v166 = vpop.f32.mrb[0].mxu0
    %v167 = vadd.f32 %v100, %v166
    %v168 = vpop.f32.mrb[0].mxu0
    %v169 = vpop.f32.mrb[0].mxu0
    %v170 = vadd.f32 %v101, %v169
    %v171 = vpop.f32.mrb[0].mxu0
    %172 = vmatprep.mubr.bf16.mxu0 0
    %173 = vmatmul.mubr.bf16.gmra.mrb[0].mxu0 %v114
    %v174 = vpop.f32.mrb[0].mxu0
    %v175 = vadd.f32 %v102, %v174
    %v176 = vpop.f32.mrb[0].mxu0
    %v177 = vpop.f32.mrb[0].mxu0
    %v178 = vpop.f32.mrb[0].mxu0
    %179 = vdwg.mxu0
    %v181 = vsel %vm103, %v92, 0
    %v184 = vsel %vm103, %v93, 0
    %v187 = vsel %vm103, %v94, 0
    %v190 = vsel %vm103, %v95, 0
    %192 = vmatprep.subr.bf16.mxu0 0
    %193 = vmatpush1.bf16.xpose.msra.mxu0 %v181
    %194 = vmatprep.subr.bf16.mxu0 0
    %195 = vmatpush1.bf16.xpose.msra.mxu0 %v184
    %196 = vmatprep.subr.bf16.mxu0 0
    %197 = vmatpush1.bf16.xpose.msra.mxu0 %v187
    %198 = vmatprep.subr.bf16.mxu0 0
    %199 = vmatpush1.bf16.xpose.msra.mxu0 %v190
    %200 = vmatprep.subr.bf16.mxu0 0
    %201 = vmatpush1.bf16.xpose.msra.mxu0 0
    %202 = vmatprep.subr.bf16.mxu0 0
    %203 = vmatpush1.bf16.xpose.msra.mxu0 0
    %204 = vmatprep.subr.bf16.mxu0 0
    %205 = vmatpush1.bf16.xpose.msra.mxu0 0
    %206 = vmatprep.subr.bf16.mxu0 0
    %207 = vmatpush1.bf16.xpose.msra.mxu0 0
    %208 = vmatprep.subr.bf16.mxu0 0
    %209 = vmatpush1.bf16.xpose.msra.mxu0 0
    %210 = vmatprep.subr.bf16.mxu0 0
    %211 = vmatpush1.bf16.xpose.msra.mxu0 0
    %212 = vmatprep.subr.bf16.mxu0 0
    %213 = vmatpush1.bf16.xpose.msra.mxu0 0
    %214 = vmatprep.subr.bf16.mxu0 0
    %215 = vmatpush1.bf16.xpose.msra.mxu0 0
    %216 = vmatprep.subr.bf16.mxu0 0
    %217 = vmatpush1.bf16.xpose.msra.mxu0 0
    %218 = vmatprep.subr.bf16.mxu0 0
    %219 = vmatpush1.bf16.xpose.msra.mxu0 0
    %220 = vmatprep.subr.bf16.mxu0 0
    %221 = vmatpush1.bf16.xpose.msra.mxu0 0
    %222 = vmatprep.subr.bf16.mxu0 0
    %223 = vmatpush1.bf16.xpose.msra.mxu0 0
    %224 = vmatprep.mubr.bf16.mxu0 0
    %225 = vmatmul.mubr.bf16.gmra.mrb[0].mxu0 %v181
    %v226 = vpop.f32.mrb[0].mxu0
    %v227 = vadd.f32 %v96, %v226
    %v228 = vpop.f32.mrb[0].mxu0
    %v229 = vpop.f32.mrb[0].mxu0
    %v230 = vadd.f32 %v97, %v229
    %v231 = vpop.f32.mrb[0].mxu0
    %232 = vmatprep.mubr.bf16.mxu0 0
    %233 = vmatmul.mubr.bf16.gmra.mrb[0].mxu0 %v184
    %v234 = vpop.f32.mrb[0].mxu0
    %v235 = vadd.f32 %v98, %v234
    %v236 = vpop.f32.mrb[0].mxu0
    %v237 = vpop.f32.mrb[0].mxu0
    %v238 = vadd.f32 %v99, %v237
    %v239 = vpop.f32.mrb[0].mxu0
    %240 = vmatprep.mubr.bf16.mxu0 0
    %241 = vmatmul.mubr.bf16.gmra.mrb[0].mxu0 %v187
    %v242 = vpop.f32.mrb[0].mxu0
    %v243 = vadd.f32 %v100, %v242
    %v244 = vpop.f32.mrb[0].mxu0
    %v245 = vpop.f32.mrb[0].mxu0
    %v246 = vadd.f32 %v101, %v245
    %v247 = vpop.f32.mrb[0].mxu0
    %248 = vmatprep.mubr.bf16.mxu0 0
    %249 = vmatmul.mubr.bf16.gmra.mrb[0].mxu0 %v190
    %v250 = vpop.f32.mrb[0].mxu0
    %v251 = vadd.f32 %v102, %v250
    %v252 = vpop.f32.mrb[0].mxu0
    %v253 = vpop.f32.mrb[0].mxu0
    %v254 = vpop.f32.mrb[0].mxu0
    %255 = vdwg.mxu0
    %v256 = vld [vmem:[#allocation5] sm:$0xff]
    %v257 = vld [vmem:[#allocation5 + $0x8] sm:$0xff]
    %v258 = vld [vmem:[#allocation5 + $0x10] sm:$0xff]
    %v259 = vld [vmem:[#allocation5 + $0x18] sm:$0xff]
    %v260 = vld [vmem:[#allocation5 + $0x20] sm:$0xff]
    %v261 = vld [vmem:[#allocation5 + $0x28] sm:$0xff]
    %v262 = vld [vmem:[#allocation5 + $0x30] sm:$0xff]
    %v263 = vld [vmem:[#allocation5 + $0x38] sm:$0xff]
    %v264 = vld [vmem:[#allocation5 + $0x40] sm:$0xff]
    %v265 = vld [vmem:[#allocation5 + $0x48] sm:$0xff]
    %v266 = vld [vmem:[#allocation5 + $0x50] sm:$0xff]
    %v267 = vld [vmem:[#allocation5 + $0x58] sm:$0xff]
    %v268 = vld [vmem:[#allocation5 + $0x60] sm:$0xff]
    %v269 = vld [vmem:[#allocation5 + $0x68] sm:$0xff]
    %v270 = vadd.f32 %v151, %v256
    %v271 = vadd.f32 %v154, %v257
    %v272 = vadd.f32 %v159, %v258
    %v273 = vadd.f32 %v162, %v259
    %v274 = vadd.f32 %v167, %v260
    %v275 = vadd.f32 %v170, %v261
    %v276 = vadd.f32 %v175, %v262
    %v277 = vadd.f32 %v227, %v263
    %v278 = vadd.f32 %v230, %v264
    %v279 = vadd.f32 %v235, %v265
    %v280 = vadd.f32 %v238, %v266
    %v281 = vadd.f32 %v243, %v267
    %v282 = vadd.f32 %v246, %v268
    %v283 = vadd.f32 %v251, %v269
    %v284 = vld [vmem:[#allocation7] sm:$0xff]
    %v285 = vld [vmem:[#allocation7 + $0x8] sm:$0xff]
    %v286 = vld [vmem:[#allocation7 + $0x10] sm:$0xff]
    %v287 = vld [vmem:[#allocation7 + $0x18] sm:$0xff]
    %v288 = vld [vmem:[#allocation7 + $0x20] sm:$0xff]
    %v289 = vld [vmem:[#allocation7 + $0x28] sm:$0xff]
    %v290 = vld [vmem:[#allocation7 + $0x30] sm:$0xff]
    %v291 = vld [vmem:[#allocation7 + $0x38] sm:$0xff]
    %v292 = vld [vmem:[#allocation7 + $0x40] sm:$0xff]
    %v293 = vld [vmem:[#allocation7 + $0x48] sm:$0xff]
    %v294 = vld [vmem:[#allocation7 + $0x50] sm:$0xff]
    %v295 = vld [vmem:[#allocation7 + $0x58] sm:$0xff]
    %v296 = vld [vmem:[#allocation7 + $0x60] sm:$0xff]
    %v297 = vld [vmem:[#allocation7 + $0x68] sm:$0xff]
    %v298 = vadd.f32 %v270, %v284
    %v299 = vadd.f32 %v271, %v285
    %v300 = vadd.f32 %v272, %v286
    %v301 = vadd.f32 %v273, %v287
    %v302 = vadd.f32 %v274, %v288
    %v303 = vadd.f32 %v275, %v289
    %v304 = vadd.f32 %v276, %v290
    %v305 = vadd.f32 %v277, %v291
    %v306 = vadd.f32 %v278, %v292
    %v307 = vadd.f32 %v279, %v293
    %v308 = vadd.f32 %v280, %v294
    %v309 = vadd.f32 %v281, %v295
    %v310 = vadd.f32 %v282, %v296
    %v311 = vadd.f32 %v283, %v297
    %vm312 = vcmask 457728
    %v313 = vsel %vm312, %v298, -inf
    %314 = vmax.xlane.f32.xlu0 %v313
    %v315 = vpop.xlane.xlu0 %314
    %v316 = vsel %vm312, %v299, -inf
    %317 = vmax.xlane.f32.xlu0 %v316
    %v318 = vpop.xlane.xlu0 %317
    %v319 = vsel %vm312, %v300, -inf
    %320 = vmax.xlane.f32.xlu0 %v319
    %v321 = vpop.xlane.xlu0 %320
    %v322 = vsel %vm312, %v301, -inf
    %323 = vmax.xlane.f32.xlu0 %v322
    %v324 = vpop.xlane.xlu0 %323
    %v325 = vsel %vm312, %v302, -inf
    %326 = vmax.xlane.f32.xlu0 %v325
    %v327 = vpop.xlane.xlu0 %326
    %v328 = vsel %vm312, %v303, -inf
    %329 = vmax.xlane.f32.xlu0 %v328
    %v330 = vpop.xlane.xlu0 %329
    %v331 = vsel %vm312, %v304, -inf
    %332 = vmax.xlane.f32.xlu0 %v331
    %v333 = vpop.xlane.xlu0 %332
    %v334 = vsel %vm312, %v305, -inf
    %335 = vmax.xlane.f32.xlu0 %v334
    %v336 = vpop.xlane.xlu0 %335
    %v337 = vsel %vm312, %v306, -inf
    %338 = vmax.xlane.f32.xlu0 %v337
    %v339 = vpop.xlane.xlu0 %338
    %v340 = vsel %vm312, %v307, -inf
    %341 = vmax.xlane.f32.xlu0 %v340
    %v342 = vpop.xlane.xlu0 %341
    %v343 = vsel %vm312, %v308, -inf
    %344 = vmax.xlane.f32.xlu0 %v343
    %v345 = vpop.xlane.xlu0 %344
    %v346 = vsel %vm312, %v309, -inf
    %347 = vmax.xlane.f32.xlu0 %v346
    %v348 = vpop.xlane.xlu0 %347
    %v349 = vsel %vm312, %v310, -inf
    %350 = vmax.xlane.f32.xlu0 %v349
    %v351 = vpop.xlane.xlu0 %350
    %v352 = vsel %vm312, %v311, -inf
    %353 = vmax.xlane.f32.xlu0 %v352
    %v354 = vpop.xlane.xlu0 %353
    %v355 = vsub.f32 %v298, %v315
    %v356 = vsub.f32 %v299, %v318
    %v357 = vsub.f32 %v300, %v321
    %v358 = vsub.f32 %v301, %v324
    %v359 = vsub.f32 %v302, %v327
    %v360 = vsub.f32 %v303, %v330
    %v361 = vsub.f32 %v304, %v333
    %v362 = vsub.f32 %v305, %v336
    %v363 = vsub.f32 %v306, %v339
    %v364 = vsub.f32 %v307, %v342
    %v365 = vsub.f32 %v308, %v345
    %v366 = vsub.f32 %v309, %v348
    %v367 = vsub.f32 %v310, %v351
    %v368 = vsub.f32 %v311, %v354
    %v369 = vmul.f32 %v355, 1.442695
    %v370 = vpow.pop %v369
    %v371 = vmul.f32 %v356, 1.442695
    %v372 = vpow.pop %v371
    %v373 = vmul.f32 %v357, 1.442695
    %v374 = vpow.pop %v373
    %v375 = vmul.f32 %v358, 1.442695
    %v376 = vpow.pop %v375
    %v377 = vmul.f32 %v359, 1.442695
    %v378 = vpow.pop %v377
    %v379 = vmul.f32 %v360, 1.442695
    %v380 = vpow.pop %v379
    %v381 = vmul.f32 %v361, 1.442695
    %v382 = vpow.pop %v381
    %v383 = vmul.f32 %v362, 1.442695
    %v384 = vpow.pop %v383
    %v385 = vmul.f32 %v363, 1.442695
    %v386 = vpow.pop %v385
    %v387 = vmul.f32 %v364, 1.442695
    %v388 = vpow.pop %v387
    %v389 = vmul.f32 %v365, 1.442695
    %v390 = vpow.pop %v389
    %v391 = vmul.f32 %v366, 1.442695
    %v392 = vpow.pop %v391
    %v393 = vmul.f32 %v367, 1.442695
    %v394 = vpow.pop %v393
    %v395 = vmul.f32 %v368, 1.442695
    %v396 = vpow.pop %v395
    %v397 = vsel %vm312, %v370, 0.0
    %398 = vadd.xlane.f32.xlu0 %v397
    %v399 = vpop.xlane.xlu0 %398
    %v400 = vsel %vm312, %v372, 0.0
    %401 = vadd.xlane.f32.xlu0 %v400
    %v402 = vpop.xlane.xlu0 %401
    %v403 = vsel %vm312, %v374, 0.0
    %404 = vadd.xlane.f32.xlu0 %v403
    %v405 = vpop.xlane.xlu0 %404
    %v406 = vsel %vm312, %v376, 0.0
    %407 = vadd.xlane.f32.xlu0 %v406
    %v408 = vpop.xlane.xlu0 %407
    %v409 = vsel %vm312, %v378, 0.0
    %410 = vadd.xlane.f32.xlu0 %v409
    %v411 = vpop.xlane.xlu0 %410
    %v412 = vsel %vm312, %v380, 0.0
    %413 = vadd.xlane.f32.xlu0 %v412
    %v414 = vpop.xlane.xlu0 %413
    %v415 = vsel %vm312, %v382, 0.0
    %416 = vadd.xlane.f32.xlu0 %v415
    %v417 = vpop.xlane.xlu0 %416
    %v418 = vsel %vm312, %v384, 0.0
    %419 = vadd.xlane.f32.xlu0 %v418
    %v420 = vpop.xlane.xlu0 %419
    %v421 = vsel %vm312, %v386, 0.0
    %422 = vadd.xlane.f32.xlu0 %v421
    %v423 = vpop.xlane.xlu0 %422
    %v424 = vsel %vm312, %v388, 0.0
    %425 = vadd.xlane.f32.xlu0 %v424
    %v426 = vpop.xlane.xlu0 %425
    %v427 = vsel %vm312, %v390, 0.0
    %428 = vadd.xlane.f32.xlu0 %v427
    %v429 = vpop.xlane.xlu0 %428
    %v430 = vsel %vm312, %v392, 0.0
    %431 = vadd.xlane.f32.xlu0 %v430
    %v432 = vpop.xlane.xlu0 %431
    %v433 = vsel %vm312, %v394, 0.0
    %434 = vadd.xlane.f32.xlu0 %v433
    %v435 = vpop.xlane.xlu0 %434
    %v436 = vsel %vm312, %v396, 0.0
    %437 = vadd.xlane.f32.xlu0 %v436
    %v438 = vpop.xlane.xlu0 %437
    %v439 = vrcp.pop %v399
    %v440 = vrcp.pop %v402
    %v441 = vrcp.pop %v405
    %v442 = vrcp.pop %v408
    %v443 = vrcp.pop %v411
    %v444 = vrcp.pop %v414
    %v445 = vrcp.pop %v417
    %v446 = vrcp.pop %v420
    %v447 = vrcp.pop %v423
    %v448 = vrcp.pop %v426
    %v449 = vrcp.pop %v429
    %v450 = vrcp.pop %v432
    %v451 = vrcp.pop %v435
    %v452 = vrcp.pop %v438
    %v453 = vpack.c.bf16 %v372, %v370
    %v454 = vpack.c.bf16 %v376, %v374
    %v455 = vpack.c.bf16 %v380, %v378
    %v456 = vpack.c.bf16 %v382, %v382
    %v457 = vpack.c.bf16 %v386, %v384
    %v458 = vpack.c.bf16 %v390, %v388
    %v459 = vpack.c.bf16 %v394, %v392
    %v460 = vpack.c.bf16 %v396, %v396
    %v462 = vsel %vm312, %v453, 0
    %v465 = vsel %vm312, %v454, 0
    %v468 = vsel %vm312, %v455, 0
    %v471 = vsel %vm312, %v456, 0
    %vm473 = vcmask 1043456
    %v474 = vsel %vm473, %v91, 0
    %476 = vmatprep.subr.bf16.mxu0 0
    %477 = vmatpush1.bf16.msra.mxu0 %v88
    %478 = vmatprep.subr.bf16.mxu0 0
    %479 = vmatpush1.bf16.msra.mxu0 %v89
    %480 = vmatprep.subr.bf16.mxu0 0
    %481 = vmatpush1.bf16.msra.mxu0 %v90
    %482 = vmatprep.subr.bf16.mxu0 0
    %483 = vmatpush1.bf16.msra.mxu0 %v474
    %484 = vmatprep.subr.bf16.mxu0 0
    %485 = vmatpush1.bf16.msra.mxu0 0
    %486 = vmatprep.subr.bf16.mxu0 0
    %487 = vmatpush1.bf16.msra.mxu0 0
    %488 = vmatprep.subr.bf16.mxu0 0
    %489 = vmatpush1.bf16.msra.mxu0 0
    %490 = vmatprep.subr.bf16.mxu0 0
    %491 = vmatpush1.bf16.msra.mxu0 0
    %492 = vmatprep.subr.bf16.mxu0 0
    %493 = vmatpush1.bf16.msra.mxu0 0
    %494 = vmatprep.subr.bf16.mxu0 0
    %495 = vmatpush1.bf16.msra.mxu0 0
    %496 = vmatprep.subr.bf16.mxu0 0
    %497 = vmatpush1.bf16.msra.mxu0 0
    %498 = vmatprep.subr.bf16.mxu0 0
    %499 = vmatpush1.bf16.msra.mxu0 0
    %500 = vmatprep.subr.bf16.mxu0 0
    %501 = vmatpush1.bf16.msra.mxu0 0
    %502 = vmatprep.subr.bf16.mxu0 0
    %503 = vmatpush1.bf16.msra.mxu0 0
    %504 = vmatprep.subr.bf16.mxu0 0
    %505 = vmatpush1.bf16.msra.mxu0 0
    %506 = vmatprep.subr.bf16.mxu0 0
    %507 = vmatpush1.bf16.msra.mxu0 0
    %508 = vmatprep.mubr.bf16.mxu0 0
    %509 = vmatmul.mubr.bf16.gmra.mrb[0].mxu0 %v462
    %v510 = vpop.f32.mrb[0].mxu0
    %v511 = vadd.f32 0.0, %v510
    %v512 = vpop.f32.mrb[0].mxu0
    %v513 = vpop.f32.mrb[0].mxu0
    %v514 = vadd.f32 0.0, %v513
    %v515 = vpop.f32.mrb[0].mxu0
    %516 = vmatprep.mubr.bf16.mxu0 0
    %517 = vmatmul.mubr.bf16.gmra.mrb[0].mxu0 %v465
    %v518 = vpop.f32.mrb[0].mxu0
    %v519 = vadd.f32 0.0, %v518
    %v520 = vpop.f32.mrb[0].mxu0
    %v521 = vpop.f32.mrb[0].mxu0
    %v522 = vadd.f32 0.0, %v521
    %v523 = vpop.f32.mrb[0].mxu0
    %524 = vmatprep.mubr.bf16.mxu0 0
    %525 = vmatmul.mubr.bf16.gmra.mrb[0].mxu0 %v468
    %v526 = vpop.f32.mrb[0].mxu0
    %v527 = vadd.f32 0.0, %v526
    %v528 = vpop.f32.mrb[0].mxu0
    %v529 = vpop.f32.mrb[0].mxu0
    %v530 = vadd.f32 0.0, %v529
    %v531 = vpop.f32.mrb[0].mxu0
    %532 = vmatprep.mubr.bf16.mxu0 0
    %533 = vmatmul.mubr.bf16.gmra.mrb[0].mxu0 %v471
    %v534 = vpop.f32.mrb[0].mxu0
    %v535 = vadd.f32 0.0, %v534
    %v536 = vpop.f32.mrb[0].mxu0
    %v537 = vpop.f32.mrb[0].mxu0
    %v538 = vpop.f32.mrb[0].mxu0
    %539 = vdwg.mxu0
    %v541 = vsel %vm312, %v457, 0
    %v544 = vsel %vm312, %v458, 0
    %v547 = vsel %vm312, %v459, 0
    %v550 = vsel %vm312, %v460, 0
    %v552 = vsel %vm473, %v95, 0
    %554 = vmatprep.subr.bf16.mxu0 0
    %555 = vmatpush1.bf16.msra.mxu0 %v92
    %556 = vmatprep.subr.bf16.mxu0 0
    %557 = vmatpush1.bf16.msra.mxu0 %v93
    %558 = vmatprep.subr.bf16.mxu0 0
    %559 = vmatpush1.bf16.msra.mxu0 %v94
    %560 = vmatprep.subr.bf16.mxu0 0
    %561 = vmatpush1.bf16.msra.mxu0 %v552
    %562 = vmatprep.subr.bf16.mxu0 0
    %563 = vmatpush1.bf16.msra.mxu0 0
    %564 = vmatprep.subr.bf16.mxu0 0
    %565 = vmatpush1.bf16.msra.mxu0 0
    %566 = vmatprep.subr.bf16.mxu0 0
    %567 = vmatpush1.bf16.msra.mxu0 0
    %568 = vmatprep.subr.bf16.mxu0 0
    %569 = vmatpush1.bf16.msra.mxu0 0
    %570 = vmatprep.subr.bf16.mxu0 0
    %571 = vmatpush1.bf16.msra.mxu0 0
    %572 = vmatprep.subr.bf16.mxu0 0
    %573 = vmatpush1.bf16.msra.mxu0 0
    %574 = vmatprep.subr.bf16.mxu0 0
    %575 = vmatpush1.bf16.msra.mxu0 0
    %576 = vmatprep.subr.bf16.mxu0 0
    %577 = vmatpush1.bf16.msra.mxu0 0
    %578 = vmatprep.subr.bf16.mxu0 0
    %579 = vmatpush1.bf16.msra.mxu0 0
    %580 = vmatprep.subr.bf16.mxu0 0
    %581 = vmatpush1.bf16.msra.mxu0 0
    %582 = vmatprep.subr.bf16.mxu0 0
    %583 = vmatpush1.bf16.msra.mxu0 0
    %584 = vmatprep.subr.bf16.mxu0 0
    %585 = vmatpush1.bf16.msra.mxu0 0
    %586 = vmatprep.mubr.bf16.mxu0 0
    %587 = vmatmul.mubr.bf16.gmra.mrb[0].mxu0 %v541
    %v588 = vpop.f32.mrb[0].mxu0
    %v589 = vadd.f32 0.0, %v588
    %v590 = vpop.f32.mrb[0].mxu0
    %v591 = vpop.f32.mrb[0].mxu0
    %v592 = vadd.f32 0.0, %v591
    %v593 = vpop.f32.mrb[0].mxu0
    %594 = vmatprep.mubr.bf16.mxu0 0
    %595 = vmatmul.mubr.bf16.gmra.mrb[0].mxu0 %v544
    %v596 = vpop.f32.mrb[0].mxu0
    %v597 = vadd.f32 0.0, %v596
    %v598 = vpop.f32.mrb[0].mxu0
    %v599 = vpop.f32.mrb[0].mxu0
    %v600 = vadd.f32 0.0, %v599
    %v601 = vpop.f32.mrb[0].mxu0
    %602 = vmatprep.mubr.bf16.mxu0 0
    %603 = vmatmul.mubr.bf16.gmra.mrb[0].mxu0 %v547
    %v604 = vpop.f32.mrb[0].mxu0
    %v605 = vadd.f32 0.0, %v604
    %v606 = vpop.f32.mrb[0].mxu0
    %v607 = vpop.f32.mrb[0].mxu0
    %v608 = vadd.f32 0.0, %v607
    %v609 = vpop.f32.mrb[0].mxu0
    %610 = vmatprep.mubr.bf16.mxu0 0
    %611 = vmatmul.mubr.bf16.gmra.mrb[0].mxu0 %v550
    %v612 = vpop.f32.mrb[0].mxu0
    %v613 = vadd.f32 0.0, %v612
    %v614 = vpop.f32.mrb[0].mxu0
    %v615 = vpop.f32.mrb[0].mxu0
    %v616 = vpop.f32.mrb[0].mxu0
    %617 = vdwg.mxu0
    %v618 = vmul.f32 %v511, %v439
    %v619 = vmul.f32 %v514, %v440
    %v620 = vmul.f32 %v519, %v441
    %v621 = vmul.f32 %v522, %v442
    %v622 = vmul.f32 %v527, %v443
    %v623 = vmul.f32 %v530, %v444
    %v624 = vmul.f32 %v535, %v445
    %v625 = vmul.f32 %v589, %v446
    %v626 = vmul.f32 %v592, %v447
    %v627 = vmul.f32 %v597, %v448
    %v628 = vmul.f32 %v600, %v449
    %v629 = vmul.f32 %v605, %v450
    %v630 = vmul.f32 %v608, %v451
    %v631 = vmul.f32 %v613, %v452
    %632 = vst.msk [vmem:[#allocation10] sm:$0xff] %vm103, %v618
    %633 = vst.msk [vmem:[#allocation10 + $0x8] sm:$0xff] %vm103, %v619
    %634 = vst.msk [vmem:[#allocation10 + $0x10] sm:$0xff] %vm103, %v620
    %635 = vst.msk [vmem:[#allocation10 + $0x18] sm:$0xff] %vm103, %v621
    %636 = vst.msk [vmem:[#allocation10 + $0x20] sm:$0xff] %vm103, %v622
    %637 = vst.msk [vmem:[#allocation10 + $0x28] sm:$0xff] %vm103, %v623
    %638 = vst.msk [vmem:[#allocation10 + $0x30] sm:$0xff] %vm103, %v624
    %639 = vst.msk [vmem:[#allocation10 + $0x38] sm:$0xff] %vm103, %v625
    %640 = vst.msk [vmem:[#allocation10 + $0x40] sm:$0xff] %vm103, %v626
    %641 = vst.msk [vmem:[#allocation10 + $0x48] sm:$0xff] %vm103, %v627
    %642 = vst.msk [vmem:[#allocation10 + $0x50] sm:$0xff] %vm103, %v628
    %643 = vst.msk [vmem:[#allocation10 + $0x58] sm:$0xff] %vm103, %v629
    %644 = vst.msk [vmem:[#allocation10 + $0x60] sm:$0xff] %vm103, %v630
    %645 = vst.msk [vmem:[#allocation10 + $0x68] sm:$0xff] %vm103, %v631
    // Predicated region
    $region34: #{tpu_custom_call.1} parent=1 // pred_check
      _
    $region35: #{tpu_custom_call.1} parent=1 // pred_check_branch
      %647 = sbr.rel (0) target = $region37
    $region36: #{tpu_custom_call.1} parent=1 // pred_region
      %s649 = ssub.s32 1792, 1792
      %650 = vsyncadd [#allocation4], %s649
      %s651 = sshll.u32 [#allocation10], 4
      %s652 = int_to_ptr.vmem [resolvable:$true] %s651
      %657 = dma.vmem_to_hbm [thread:$0]  %s652, 1792, %s4, [#allocation4], 128, 128, 8
    $region37: #{tpu_custom_call.1} parent=1 // pred_fallthru
      _
    // Predicated region
    $region38: #{tpu_custom_call.1} parent=1 // pred_check
      _
    $region39: #{tpu_custom_call.1} parent=1 // pred_check_branch
      %659 = sbr.rel (0) target = $region41
    $region40: #{tpu_custom_call.1} parent=1 // pred_region
      %660 = dma.done [#allocation4], 1792
    $region41: #{tpu_custom_call.1} parent=1 // pred_fallthru
      _
    %661 = vsyncpa [#allocation3], 1
    %662 = vsyncpa [#allocation6], 1
    %663 = vsyncpa [#allocation9], 1
    %664 = vsyncpa [#allocation4], 1

</llo_original>
